<compile_context>
chip_gen: v7x
topology: tpu7x:2x2x1
jax: 0.10.0
libtpu: 0.0.40
codegen_flags: <defaults>
</compile_context>

<pallas_src>
import functools

import numpy as np
import jax
import jax.numpy as jnp
from jax import lax
from jax.experimental import pallas as pl
from jax.experimental.pallas import tpu as pltpu


def _tap_masks(H, W, C):
    """(9*C, H*W) f32 mask; rows k*C..k*C+C-1 hold the validity mask of tap k."""
    m = np.zeros((9, H * W), np.float32)
    for dy in range(3):
        for dx in range(3):
            oy, ox = dy - 1, dx - 1
            hh = np.arange(H)[:, None] + oy
            ww = np.arange(W)[None, :] + ox
            ok = (hh >= 0) & (hh < H) & (ww >= 0) & (ww < W)
            m[dy * 3 + dx] = ok.astype(np.float32).reshape(-1)
    return jnp.asarray(np.repeat(m, C, axis=0))


def _resblock_kernel(x_ref, mask_ref, w1_ref, b1_ref, w2_ref, b2_ref,
                     out_ref, x_acc, *, W, HW):
    t = pl.program_id(1)
    n_t = pl.num_programs(1)

    @pl.when(t == 0)
    def _():
        x_acc[...] = x_ref[0].astype(jnp.float32)

    x = x_acc[...]                       # (C, HW) f32 running residual state
    mask = mask_ref[...]                 # (9*C, HW) f32 border mask

    def conv3x3(inp, w_r, b_col):
        # inp: (C, HW); w_r: (Cout, 9*Cin); b_col: (Cout, 1)
        taps = []
        for dy in range(3):
            for dx in range(3):
                off = (dy - 1) * W + (dx - 1)
                sh = (-off) % HW
                taps.append(inp if sh == 0 else pltpu.roll(inp, sh, 1))
        im2col = jnp.concatenate(taps, axis=0) * mask        # (9*Cin, HW)
        acc = jnp.dot(w_r, im2col, preferred_element_type=jnp.float32)
        return acc + b_col                                   # (Cout, HW)

    h = conv3x3(x, w1_ref[0].astype(jnp.float32),
                b1_ref[0].astype(jnp.float32))
    h = jnp.maximum(h, 0.0)                                  # ReLU
    h = conv3x3(h, w2_ref[0].astype(jnp.float32),
                b2_ref[0].astype(jnp.float32))

    x_new = x + h                                            # residual add
    x_acc[...] = x_new

    @pl.when(t == n_t - 1)
    def _():
        out_ref[...] = x_new[None].astype(out_ref.dtype)


def projnet_m(x_nchw, w1, b1, w2, b2):
    """x_nchw: (B, C, H, W); w1/w2: (T, Cout, Cin, 3, 3); b1/b2: (T, C)."""
    B, C, H, Wd = x_nchw.shape
    T = w1.shape[0]
    HW = H * Wd

    x2 = x_nchw.reshape(B, C, HW)                            # lane-dense
    # (T, Cout, Cin, 3, 3) -> (T, Cout, 9*Cin); column (dy*3+dx)*Cin + ci
    w1r = jnp.transpose(w1, (0, 1, 3, 4, 2)).reshape(T, C, 9 * C)
    w2r = jnp.transpose(w2, (0, 1, 3, 4, 2)).reshape(T, C, 9 * C)
    b1c = b1[:, :, None]                                     # (T, C, 1)
    b2c = b2[:, :, None]
    mask = _tap_masks(H, Wd, C)                              # (9*C, HW)

    kernel = functools.partial(_resblock_kernel, W=Wd, HW=HW)

    itemsize = x_nchw.dtype.itemsize
    bytes_accessed = (2 * x2.size * itemsize + mask.size * 4
                      + (w1r.size + w2r.size + b1c.size + b2c.size) * itemsize)
    cost = pl.CostEstimate(flops=4 * 9 * B * T * HW * C * C,
                           transcendentals=0,
                           bytes_accessed=bytes_accessed)

    out = pl.pallas_call(
        kernel,
        out_shape=jax.ShapeDtypeStruct((B, C, HW), x_nchw.dtype),
        grid_spec=pltpu.PrefetchScalarGridSpec(
            num_scalar_prefetch=0,
            grid=(B, T),
            in_specs=[
                pl.BlockSpec((1, C, HW), lambda b, t: (b, 0, 0)),      # x
                pl.BlockSpec((9 * C, HW), lambda b, t: (0, 0)),        # masks
                pl.BlockSpec((1, C, 9 * C), lambda b, t: (t, 0, 0)),   # w1
                pl.BlockSpec((1, C, 1), lambda b, t: (t, 0, 0)),       # b1
                pl.BlockSpec((1, C, 9 * C), lambda b, t: (t, 0, 0)),   # w2
                pl.BlockSpec((1, C, 1), lambda b, t: (t, 0, 0)),       # b2
            ],
            out_specs=pl.BlockSpec((1, C, HW), lambda b, t: (b, 0, 0)),
            scratch_shapes=[pltpu.VMEM((C, HW), jnp.float32)],         # running X
        ),
        compiler_params=pltpu.CompilerParams(
            dimension_semantics=("parallel", "arbitrary")),
        cost_estimate=cost,
    )(x2, mask, w1r, b1c, w2r, b2c)

    return out.reshape(B, C, H, Wd)


def projnet_ref(x_nchw, w1, b1, w2, b2):
    """Pure-JAX reference using lax.conv (independent of the kernel path)."""
    x = jnp.transpose(x_nchw, (0, 2, 3, 1))
    T = w1.shape[0]
    dn = lax.conv_dimension_numbers(x.shape, (3, 3, 1, 1),
                                    ('NHWC', 'HWIO', 'NHWC'))
    for t in range(T):
        k1 = jnp.transpose(w1[t], (2, 3, 1, 0))              # (3,3,Cin,Cout)
        k2 = jnp.transpose(w2[t], (2, 3, 1, 0))
        h = lax.conv_general_dilated(x, k1, (1, 1), 'SAME', dimension_numbers=dn,
                                     precision=lax.Precision.HIGHEST) + b1[t]
        h = jnp.maximum(h, 0.0)
        h = lax.conv_general_dilated(h, k2, (1, 1), 'SAME', dimension_numbers=dn,
                                     precision=lax.Precision.HIGHEST) + b2[t]
        x = x + h
    return jnp.transpose(x, (0, 3, 1, 2))


if __name__ == "__main__":
    B, C, H, W, T = 2, 4, 16, 16, 2

    key = jax.random.PRNGKey(0)
    ks = jax.random.split(key, 5)
    x = jax.random.normal(ks[0], (B, C, H, W), jnp.float32)
    # deterministic synthetic parameters (PyTorch shapes: Conv2d(C, C, 3))
    w1 = 0.1 * jax.random.normal(ks[1], (T, C, C, 3, 3), jnp.float32)
    b1 = 0.1 * jax.random.normal(ks[2], (T, C), jnp.float32)
    w2 = 0.1 * jax.random.normal(ks[3], (T, C, C, 3, 3), jnp.float32)
    b2 = 0.1 * jax.random.normal(ks[4], (T, C), jnp.float32)

    out = jax.block_until_ready(projnet_m(x, w1, b1, w2, b2))
    ref = jax.block_until_ready(projnet_ref(x, w1, b1, w2, b2))

    assert out.shape == (B, C, H, W)
    max_err = float(jnp.max(jnp.abs(out - ref)))
    assert max_err < 5e-3, f"max abs err {max_err}"
    print("KERNEL_OK")
</pallas_src>

<mosaic_0001>
module attributes {stable_mosaic.version = 11 : i64} {
  func.func @_resblock_kernel(%arg0: i32, %arg1: i32, %arg2: memref<1x4x256xf32, #tpu.memory_space<vmem>>, %arg3: memref<36x256xf32, #tpu.memory_space<vmem>>, %arg4: memref<1x4x36xf32, #tpu.memory_space<vmem>>, %arg5: memref<1x4x1xf32, #tpu.memory_space<vmem>>, %arg6: memref<1x4x36xf32, #tpu.memory_space<vmem>>, %arg7: memref<1x4x1xf32, #tpu.memory_space<vmem>>, %arg8: memref<1x4x256xf32, #tpu.memory_space<vmem>>, %arg9: memref<4x256xf32, #tpu.memory_space<vmem>>) attributes {dimension_semantics = [#tpu.dimension_semantics<parallel>, #tpu.dimension_semantics<arbitrary>], iteration_bounds = array<i64: 2, 2>, scalar_prefetch = 0 : i64, scratch_operands = 1 : i64, tpu.core_type = #tpu.core_type<tc>, window_params = [{transform_indices = @transform_0, window_bounds = array<i64: 1, 4, 256>}, {pipeline_mode = #tpu.pipeline_mode<synchronous>, transform_indices = @transform_1, window_bounds = array<i64: 36, 256>}, {transform_indices = @transform_2, window_bounds = array<i64: 1, 4, 36>}, {transform_indices = @transform_3, window_bounds = array<i64: 1, 4, 1>}, {transform_indices = @transform_4, window_bounds = array<i64: 1, 4, 36>}, {transform_indices = @transform_5, window_bounds = array<i64: 1, 4, 1>}, {transform_indices = @transform_6, window_bounds = array<i64: 1, 4, 256>}]} {
    %c0_i32 = arith.constant 0 : i32
    %0 = arith.cmpi eq, %arg1, %c0_i32 : i32
    %1 = arith.extui %0 : i1 to i32
    %c0_i32_0 = arith.constant 0 : i32
    %2 = arith.cmpi ne, %1, %c0_i32_0 : i32
    scf.if %2 {
      %c0_30 = arith.constant 0 : index
      %c0_31 = arith.constant 0 : index
      %c0_32 = arith.constant 0 : index
      %46 = vector.load %arg2[%c0_30, %c0_31, %c0_32] : memref<1x4x256xf32, #tpu.memory_space<vmem>>, vector<1x4x256xf32>
      %47 = vector.shape_cast %46 : vector<1x4x256xf32> to vector<4x256xf32>
      %c0_33 = arith.constant 0 : index
      %c0_34 = arith.constant 0 : index
      %48 = vector.load %arg9[%c0_33, %c0_34] : memref<4x256xf32, #tpu.memory_space<vmem>>, vector<4x256xf32>
      tpu.vector_store %arg9[%c0_33, %c0_34], %47 {strides = array<i32>} : memref<4x256xf32, #tpu.memory_space<vmem>>, vector<4x256xf32>,
    } else {
    }
    %c0 = arith.constant 0 : index
    %c0_1 = arith.constant 0 : index
    %3 = vector.load %arg9[%c0, %c0_1] : memref<4x256xf32, #tpu.memory_space<vmem>>, vector<4x256xf32>
    %c0_2 = arith.constant 0 : index
    %c0_3 = arith.constant 0 : index
    %4 = vector.load %arg3[%c0_2, %c0_3] : memref<36x256xf32, #tpu.memory_space<vmem>>, vector<36x256xf32>
    %c0_4 = arith.constant 0 : index
    %c0_5 = arith.constant 0 : index
    %c0_6 = arith.constant 0 : index
    %5 = vector.load %arg4[%c0_4, %c0_5, %c0_6] : memref<1x4x36xf32, #tpu.memory_space<vmem>>, vector<1x4x36xf32>
    %6 = vector.shape_cast %5 : vector<1x4x36xf32> to vector<4x36xf32>
    %c0_7 = arith.constant 0 : index
    %c0_8 = arith.constant 0 : index
    %c0_9 = arith.constant 0 : index
    %7 = vector.load %arg5[%c0_7, %c0_8, %c0_9] : memref<1x4x1xf32, #tpu.memory_space<vmem>>, vector<1x4x1xf32>
    %8 = vector.shape_cast %7 : vector<1x4x1xf32> to vector<4x1xf32>
    %c17_i32 = arith.constant 17 : i32
    %9 = tpu.dynamic_rotate %3 by %c17_i32 dim 1 : vector<4x256xf32>, i32 -> vector<4x256xf32>
    %c16_i32 = arith.constant 16 : i32
    %10 = tpu.dynamic_rotate %3 by %c16_i32 dim 1 : vector<4x256xf32>, i32 -> vector<4x256xf32>
    %c15_i32 = arith.constant 15 : i32
    %11 = tpu.dynamic_rotate %3 by %c15_i32 dim 1 : vector<4x256xf32>, i32 -> vector<4x256xf32>
    %c1_i32 = arith.constant 1 : i32
    %12 = tpu.dynamic_rotate %3 by %c1_i32 dim 1 : vector<4x256xf32>, i32 -> vector<4x256xf32>
    %c255_i32 = arith.constant 255 : i32
    %13 = tpu.dynamic_rotate %3 by %c255_i32 dim 1 : vector<4x256xf32>, i32 -> vector<4x256xf32>
    %c241_i32 = arith.constant 241 : i32
    %14 = tpu.dynamic_rotate %3 by %c241_i32 dim 1 : vector<4x256xf32>, i32 -> vector<4x256xf32>
    %c240_i32 = arith.constant 240 : i32
    %15 = tpu.dynamic_rotate %3 by %c240_i32 dim 1 : vector<4x256xf32>, i32 -> vector<4x256xf32>
    %c239_i32 = arith.constant 239 : i32
    %16 = tpu.dynamic_rotate %3 by %c239_i32 dim 1 : vector<4x256xf32>, i32 -> vector<4x256xf32>
    %17 = tpu.concatenate %9, %10, %11, %12, %3, %13, %14, %15, %16 in 0 : vector<4x256xf32>, vector<4x256xf32>, vector<4x256xf32>, vector<4x256xf32>, vector<4x256xf32>, vector<4x256xf32>, vector<4x256xf32>, vector<4x256xf32>, vector<4x256xf32> -> vector<36x256xf32>
    %18 = arith.mulf %17, %4 : vector<36x256xf32>
    %cst = arith.constant dense<0.000000e+00> : vector<4x256xf32>
    %19 = tpu.matmul %6, %18, %cst {dimension_numbers = #tpu.dot_dimension_numbers<[1], [0], [0], [1], [0, 0, 1, 1], [], []>} : vector<4x36xf32>, vector<36x256xf32>, vector<4x256xf32> -> vector<4x256xf32>
    %20 = vector.broadcast %8 : vector<4x1xf32> to vector<4x256xf32>
    %21 = arith.addf %19, %20 : vector<4x256xf32>
    %cst_10 = arith.constant 0.000000e+00 : f32
    %22 = vector.broadcast %cst_10 : f32 to vector<4x256xf32>
    %23 = arith.maximumf %21, %22 : vector<4x256xf32>
    %c0_11 = arith.constant 0 : index
    %c0_12 = arith.constant 0 : index
    %c0_13 = arith.constant 0 : index
    %24 = vector.load %arg6[%c0_11, %c0_12, %c0_13] : memref<1x4x36xf32, #tpu.memory_space<vmem>>, vector<1x4x36xf32>
    %25 = vector.shape_cast %24 : vector<1x4x36xf32> to vector<4x36xf32>
    %c0_14 = arith.constant 0 : index
    %c0_15 = arith.constant 0 : index
    %c0_16 = arith.constant 0 : index
    %26 = vector.load %arg7[%c0_14, %c0_15, %c0_16] : memref<1x4x1xf32, #tpu.memory_space<vmem>>, vector<1x4x1xf32>
    %27 = vector.shape_cast %26 : vector<1x4x1xf32> to vector<4x1xf32>
    %c17_i32_17 = arith.constant 17 : i32
    %28 = tpu.dynamic_rotate %23 by %c17_i32_17 dim 1 : vector<4x256xf32>, i32 -> vector<4x256xf32>
    %c16_i32_18 = arith.constant 16 : i32
    %29 = tpu.dynamic_rotate %23 by %c16_i32_18 dim 1 : vector<4x256xf32>, i32 -> vector<4x256xf32>
    %c15_i32_19 = arith.constant 15 : i32
    %30 = tpu.dynamic_rotate %23 by %c15_i32_19 dim 1 : vector<4x256xf32>, i32 -> vector<4x256xf32>
    %c1_i32_20 = arith.constant 1 : i32
    %31 = tpu.dynamic_rotate %23 by %c1_i32_20 dim 1 : vector<4x256xf32>, i32 -> vector<4x256xf32>
    %c255_i32_21 = arith.constant 255 : i32
    %32 = tpu.dynamic_rotate %23 by %c255_i32_21 dim 1 : vector<4x256xf32>, i32 -> vector<4x256xf32>
    %c241_i32_22 = arith.constant 241 : i32
    %33 = tpu.dynamic_rotate %23 by %c241_i32_22 dim 1 : vector<4x256xf32>, i32 -> vector<4x256xf32>
    %c240_i32_23 = arith.constant 240 : i32
    %34 = tpu.dynamic_rotate %23 by %c240_i32_23 dim 1 : vector<4x256xf32>, i32 -> vector<4x256xf32>
    %c239_i32_24 = arith.constant 239 : i32
    %35 = tpu.dynamic_rotate %23 by %c239_i32_24 dim 1 : vector<4x256xf32>, i32 -> vector<4x256xf32>
    %36 = tpu.concatenate %28, %29, %30, %31, %23, %32, %33, %34, %35 in 0 : vector<4x256xf32>, vector<4x256xf32>, vector<4x256xf32>, vector<4x256xf32>, vector<4x256xf32>, vector<4x256xf32>, vector<4x256xf32>, vector<4x256xf32>, vector<4x256xf32> -> vector<36x256xf32>
    %37 = arith.mulf %36, %4 : vector<36x256xf32>
    %cst_25 = arith.constant dense<0.000000e+00> : vector<4x256xf32>
    %38 = tpu.matmul %25, %37, %cst_25 {dimension_numbers = #tpu.dot_dimension_numbers<[1], [0], [0], [1], [0, 0, 1, 1], [], []>} : vector<4x36xf32>, vector<36x256xf32>, vector<4x256xf32> -> vector<4x256xf32>
    %39 = vector.broadcast %27 : vector<4x1xf32> to vector<4x256xf32>
    %40 = arith.addf %38, %39 : vector<4x256xf32>
    %41 = arith.addf %3, %40 : vector<4x256xf32>
    %c0_26 = arith.constant 0 : index
    %c0_27 = arith.constant 0 : index
    %42 = vector.load %arg9[%c0_26, %c0_27] : memref<4x256xf32, #tpu.memory_space<vmem>>, vector<4x256xf32>
    tpu.vector_store %arg9[%c0_26, %c0_27], %41 {strides = array<i32>} : memref<4x256xf32, #tpu.memory_space<vmem>>, vector<4x256xf32>,
    %c1_i32_28 = arith.constant 1 : i32
    %43 = arith.cmpi eq, %arg1, %c1_i32_28 : i32
    %44 = arith.extui %43 : i1 to i32
    %c0_i32_29 = arith.constant 0 : i32
    %45 = arith.cmpi ne, %44, %c0_i32_29 : i32
    scf.if %45 {
      %46 = vector.shape_cast %41 : vector<4x256xf32> to vector<1x4x256xf32>
      %c0_30 = arith.constant 0 : index
      %c0_31 = arith.constant 0 : index
      %c0_32 = arith.constant 0 : index
      %47 = vector.load %arg8[%c0_30, %c0_31, %c0_32] : memref<1x4x256xf32, #tpu.memory_space<vmem>>, vector<1x4x256xf32>
      tpu.vector_store %arg8[%c0_30, %c0_31, %c0_32], %46 {strides = array<i32>} : memref<1x4x256xf32, #tpu.memory_space<vmem>>, vector<1x4x256xf32>,
    } else {
    }
    return
  }
  func.func @transform_0(%arg0: i32, %arg1: i32) -> (i32, i32, i32) {
    %c0_i32 = arith.constant 0 : i32
    %c0_i32_0 = arith.constant 0 : i32
    %c0_i32_1 = arith.constant 0 : i32
    return %arg0, %c0_i32, %c0_i32_0 : i32, i32, i32
  }
  func.func @transform_1(%arg0: i32, %arg1: i32) -> (i32, i32) {
    %c0_i32 = arith.constant 0 : i32
    %c0_i32_0 = arith.constant 0 : i32
    %c0_i32_1 = arith.constant 0 : i32
    return %c0_i32, %c0_i32_0 : i32, i32
  }
  func.func @transform_2(%arg0: i32, %arg1: i32) -> (i32, i32, i32) {
    %c0_i32 = arith.constant 0 : i32
    %c0_i32_0 = arith.constant 0 : i32
    %c0_i32_1 = arith.constant 0 : i32
    return %arg1, %c0_i32, %c0_i32_0 : i32, i32, i32
  }
  func.func @transform_3(%arg0: i32, %arg1: i32) -> (i32, i32, i32) {
    %c0_i32 = arith.constant 0 : i32
    %c0_i32_0 = arith.constant 0 : i32
    %c0_i32_1 = arith.constant 0 : i32
    return %arg1, %c0_i32, %c0_i32_0 : i32, i32, i32
  }
  func.func @transform_4(%arg0: i32, %arg1: i32) -> (i32, i32, i32) {
    %c0_i32 = arith.constant 0 : i32
    %c0_i32_0 = arith.constant 0 : i32
    %c0_i32_1 = arith.constant 0 : i32
    return %arg1, %c0_i32, %c0_i32_0 : i32, i32, i32
  }
  func.func @transform_5(%arg0: i32, %arg1: i32) -> (i32, i32, i32) {
    %c0_i32 = arith.constant 0 : i32
    %c0_i32_0 = arith.constant 0 : i32
    %c0_i32_1 = arith.constant 0 : i32
    return %arg1, %c0_i32, %c0_i32_0 : i32, i32, i32
  }
  func.func @transform_6(%arg0: i32, %arg1: i32) -> (i32, i32, i32) {
    %c0_i32 = arith.constant 0 : i32
    %c0_i32_0 = arith.constant 0 : i32
    %c0_i32_1 = arith.constant 0 : i32
    return %arg0, %c0_i32, %c0_i32_0 : i32, i32, i32
  }
}

</mosaic_0001>

<llo_original>
// kernel: tpu_custom_call.1
$region0: #{tpu_custom_call.1}
  #allocation0 [shape = 'u32[]', space=smem, size = 0x4, offset = 0x4, fixed_abs, tag = 'smem constant byte address 0x4 - core index']
  #allocation1 [shape = 'u32[144,128]{1,0:T(1,128)}', space=vmem, size = 0x12000, scoped, tag = 'internal scratch']
  #allocation2 [shape = 'f32[4,256]{1,0:T(4,128)}', space=vmem, size = 0x1000, scoped, tag = 'scratch operand']
  %s0 = inlined_call_operand.vmem [shape: f32[2,4,256], index: 0, kind: input, shape index: {}]
  %s1 = inlined_call_operand.hbm [shape: f32[36,256], index: 1, kind: input, shape index: {}]
  %s2 = inlined_call_operand.vmem [shape: f32[2,4,36], index: 2, kind: input, shape index: {}]
  %s3 = inlined_call_operand.vmem [shape: f32[2,4,1], index: 3, kind: input, shape index: {}]
  %s4 = inlined_call_operand.vmem [shape: f32[2,4,36], index: 4, kind: input, shape index: {}]
  %s5 = inlined_call_operand.vmem [shape: f32[2,4,1], index: 5, kind: input, shape index: {}]
  %s6 = inlined_call_operand.hbm [shape: f32[2,4,256], index: 6, kind: output, shape index: {}]
  %s7 = sld [smem:[#allocation0]]
  $region69: #{tpu_custom_call.1} parent=0
    _
  %s9 = ssub.s32 1, %s7
  %s10 = scalar_select 0, %s9, %s7
  $region1: #{tpu_custom_call.1} parent=0
    #allocation3 [shape = 'u8[40960]{0}', space=vmem, size = 0xa000, scoped, tag = 'input window, operand 1, single buffered']
    #allocation4 [shape = 's32[2]{0}', space=sflag, size = 0x8, scoped, tag = 'scoped memory for tpu_custom_call.1']
    #allocation5 [shape = 's32[2]{0}', space=sflag, size = 0x8, scoped, tag = 'scoped memory for tpu_custom_call.1']
    #allocation6 [shape = 'u8[8192]{0}', space=vmem, size = 0x2000, scoped, tag = 'output window, operand 0']
    %11 = vsyncpa [#allocation4], 0
    %12 = vsyncpa [#allocation5], 0
    %s13 = scalar_lea.sflag [#allocation5], 1
    %14 = vsyncpa %s13, 0
    loop: start=0, step=1, limit=6
    $region2: #{tpu_custom_call.1} parent=1 // loop_pre_header
      _
    $region3: #{tpu_custom_call.1} parent=1 // loop_header
      %s16 = sphi 0, %s20
      %p17 = scmp.ge.s32.totalorder %s16, 6
      %s23 = sphi 0, %s35
      %s24 = sphi 0, %s31
      %s25 = sphi 0, %s23
      %s26 = sphi 0, %s24
      %s27 = sphi 0, %s25
      %s28 = sphi 0, %s26
      %s38 = sphi 0, %s40
      %s41 = sphi 0, %s38
      %s42 = sphi 0, %s41
      %s58 = sphi 0, %s42
      %s62 = sphi 0, %s62
      %s64 = sphi 0, %s62
      %s65 = sphi 0, %s64
      %s79 = sphi 0, %s65
      %s85 = sphi 0, %s87
      %s88 = sphi 0, %s85
      %s89 = sphi 0, %s88
      %s105 = sphi 0, %s89
      %s111 = sphi 0, %s113
      %s114 = sphi 0, %s111
      %s115 = sphi 0, %s114
      %s131 = sphi 0, %s115
      %s137 = sphi 0, %s139
      %s140 = sphi 0, %s137
      %s141 = sphi 0, %s140
      %s157 = sphi 0, %s141
      %s163 = sphi 0, %s165
      %s166 = sphi 0, %s163
      %s167 = sphi 0, %s166
      %s183 = sphi 0, %s167
      %s189 = sphi 0, %s191
      %s192 = sphi 0, %s189
      %s193 = sphi 0, %s192
      %s209 = sphi 0, %s193
    $region4: #{tpu_custom_call.1} parent=1 // loop_header_branch
      %19 = sbr.rel (%p17) target = $region8
    $region5: #{tpu_custom_call.1} parent=1 // loop_body
      %s21 = ssub.s32 %s16, 1
      %s22 = ssub.s32 %s16, 2
      %s29 = sadd.s32 1, %s24
      %p30 = scmp.ge.s32.totalorder %s29, 2
      %s31 = scalar_select %p30, 0, %s29
      %s32 = sadd.s32 1, %s23
      %s33 = scalar_select %p30, %s32, %s23
      %p34 = scmp.ge.s32.totalorder %s33, 2
      %s35 = scalar_select %p34, 0, %s33
      %s36 = ssub.s32 %s23, %s35
      %p37 = scmp.eq.s32.totalorder %s36, 0
      %s39 = sadd.s32 %s38, 1
      %s40 = scalar_select %p37, %s38, %s39
      %p43 = pneg %p37
      %p44 = scmp.eq.s32.totalorder %s16, 3
      %p45 = por %p43, %p44
      %p46 = scmp.ne.s32.totalorder %s38, %s41
      %p47 = scmp.eq.s32.totalorder %s16, 0
      %p48 = por %p46, %p47
      %p49 = scmp.ne.s32.totalorder %s38, %s41
      %p50 = scmp.eq.s32.totalorder %s21, 3
      %p51 = por %p49, %p50
      %p52 = scmp.ne.s32.totalorder %s41, %s42
      %p53 = scmp.eq.s32.totalorder %s21, 0
      %p54 = por %p52, %p53
      %p55 = scmp.ne.s32.totalorder %s41, %s42
      %p56 = scmp.eq.s32.totalorder %s22, 3
      %p57 = por %p55, %p56
      %p59 = scmp.ne.s32.totalorder %s42, %s58
      %p60 = scmp.eq.s32.totalorder %s22, 0
      %p61 = por %p59, %p60
      %s63 = sadd.s32 %s62, 1
      %p66 = scmp.eq.s32.totalorder %s16, 3
      %p67 = scmp.ne.s32.totalorder %s62, %s64
      %p68 = scmp.eq.s32.totalorder %s16, 0
      %p69 = por %p67, %p68
      %p70 = scmp.ne.s32.totalorder %s62, %s64
      %p71 = scmp.eq.s32.totalorder %s21, 3
      %p72 = por %p70, %p71
      %p73 = scmp.ne.s32.totalorder %s64, %s65
      %p74 = scmp.eq.s32.totalorder %s21, 0
      %p75 = por %p73, %p74
      %p76 = scmp.ne.s32.totalorder %s64, %s65
      %p77 = scmp.eq.s32.totalorder %s22, 3
      %p78 = por %p76, %p77
      %p80 = scmp.ne.s32.totalorder %s65, %s79
      %p81 = scmp.eq.s32.totalorder %s22, 0
      %p82 = por %p80, %p81
      %s83 = ssub.s32 %s24, %s31
      %p84 = scmp.eq.s32.totalorder %s83, 0
      %s86 = sadd.s32 %s85, 1
      %s87 = scalar_select %p84, %s85, %s86
      %p90 = pneg %p84
      %p91 = scmp.eq.s32.totalorder %s16, 3
      %p92 = por %p90, %p91
      %p93 = scmp.ne.s32.totalorder %s85, %s88
      %p94 = scmp.eq.s32.totalorder %s16, 0
      %p95 = por %p93, %p94
      %p96 = scmp.ne.s32.totalorder %s85, %s88
      %p97 = scmp.eq.s32.totalorder %s21, 3
      %p98 = por %p96, %p97
      %p99 = scmp.ne.s32.totalorder %s88, %s89
      %p100 = scmp.eq.s32.totalorder %s21, 0
      %p101 = por %p99, %p100
      %p102 = scmp.ne.s32.totalorder %s88, %s89
      %p103 = scmp.eq.s32.totalorder %s22, 3
      %p104 = por %p102, %p103
      %p106 = scmp.ne.s32.totalorder %s89, %s105
      %p107 = scmp.eq.s32.totalorder %s22, 0
      %p108 = por %p106, %p107
      %s109 = ssub.s32 %s24, %s31
      %p110 = scmp.eq.s32.totalorder %s109, 0
      %s112 = sadd.s32 %s111, 1
      %s113 = scalar_select %p110, %s111, %s112
      %p116 = pneg %p110
      %p117 = scmp.eq.s32.totalorder %s16, 3
      %p118 = por %p116, %p117
      %p119 = scmp.ne.s32.totalorder %s111, %s114
      %p120 = scmp.eq.s32.totalorder %s16, 0
      %p121 = por %p119, %p120
      %p122 = scmp.ne.s32.totalorder %s111, %s114
      %p123 = scmp.eq.s32.totalorder %s21, 3
      %p124 = por %p122, %p123
      %p125 = scmp.ne.s32.totalorder %s114, %s115
      %p126 = scmp.eq.s32.totalorder %s21, 0
      %p127 = por %p125, %p126
      %p128 = scmp.ne.s32.totalorder %s114, %s115
      %p129 = scmp.eq.s32.totalorder %s22, 3
      %p130 = por %p128, %p129
      %p132 = scmp.ne.s32.totalorder %s115, %s131
      %p133 = scmp.eq.s32.totalorder %s22, 0
      %p134 = por %p132, %p133
      %s135 = ssub.s32 %s24, %s31
      %p136 = scmp.eq.s32.totalorder %s135, 0
      %s138 = sadd.s32 %s137, 1
      %s139 = scalar_select %p136, %s137, %s138
      %p142 = pneg %p136
      %p143 = scmp.eq.s32.totalorder %s16, 3
      %p144 = por %p142, %p143
      %p145 = scmp.ne.s32.totalorder %s137, %s140
      %p146 = scmp.eq.s32.totalorder %s16, 0
      %p147 = por %p145, %p146
      %p148 = scmp.ne.s32.totalorder %s137, %s140
      %p149 = scmp.eq.s32.totalorder %s21, 3
      %p150 = por %p148, %p149
      %p151 = scmp.ne.s32.totalorder %s140, %s141
      %p152 = scmp.eq.s32.totalorder %s21, 0
      %p153 = por %p151, %p152
      %p154 = scmp.ne.s32.totalorder %s140, %s141
      %p155 = scmp.eq.s32.totalorder %s22, 3
      %p156 = por %p154, %p155
      %p158 = scmp.ne.s32.totalorder %s141, %s157
      %p159 = scmp.eq.s32.totalorder %s22, 0
      %p160 = por %p158, %p159
      %s161 = ssub.s32 %s24, %s31
      %p162 = scmp.eq.s32.totalorder %s161, 0
      %s164 = sadd.s32 %s163, 1
      %s165 = scalar_select %p162, %s163, %s164
      %p168 = pneg %p162
      %p169 = scmp.eq.s32.totalorder %s16, 3
      %p170 = por %p168, %p169
      %p171 = scmp.ne.s32.totalorder %s163, %s166
      %p172 = scmp.eq.s32.totalorder %s16, 0
      %p173 = por %p171, %p172
      %p174 = scmp.ne.s32.totalorder %s163, %s166
      %p175 = scmp.eq.s32.totalorder %s21, 3
      %p176 = por %p174, %p175
      %p177 = scmp.ne.s32.totalorder %s166, %s167
      %p178 = scmp.eq.s32.totalorder %s21, 0
      %p179 = por %p177, %p178
      %p180 = scmp.ne.s32.totalorder %s166, %s167
      %p181 = scmp.eq.s32.totalorder %s22, 3
      %p182 = por %p180, %p181
      %p184 = scmp.ne.s32.totalorder %s167, %s183
      %p185 = scmp.eq.s32.totalorder %s22, 0
      %p186 = por %p184, %p185
      %s187 = ssub.s32 %s23, %s35
      %p188 = scmp.eq.s32.totalorder %s187, 0
      %s190 = sadd.s32 %s189, 1
      %s191 = scalar_select %p188, %s189, %s190
      %p194 = pneg %p188
      %p195 = scmp.eq.s32.totalorder %s16, 3
      %p196 = por %p194, %p195
      %p197 = scmp.ne.s32.totalorder %s189, %s192
      %p198 = scmp.eq.s32.totalorder %s16, 0
      %p199 = por %p197, %p198
      %p200 = scmp.ne.s32.totalorder %s189, %s192
      %p201 = scmp.eq.s32.totalorder %s21, 3
      %p202 = por %p200, %p201
      %p203 = scmp.ne.s32.totalorder %s192, %s193
      %p204 = scmp.eq.s32.totalorder %s21, 0
      %p205 = por %p203, %p204
      %p206 = scmp.ne.s32.totalorder %s192, %s193
      %p207 = scmp.eq.s32.totalorder %s22, 3
      %p208 = por %p206, %p207
      %p210 = scmp.ne.s32.totalorder %s193, %s209
      %p211 = scmp.eq.s32.totalorder %s22, 0
      %p212 = por %p210, %p211
      %p213 = scmp.le.s32.totalorder 1, %s16
      %p214 = scmp.lt.s32.totalorder %s16, 5
      %p215 = pnand %p213, %p214
      %p216 = pneg %p215
      // Predicated region
      $region9: #{tpu_custom_call.1} parent=5 // pred_check
        _
      $region10: #{tpu_custom_call.1} parent=5 // pred_check_branch
        %218 = sbr.rel (%p215) target = $region12
      $region11: #{tpu_custom_call.1} parent=5 // pred_region
        %s219 = ssub.s32 %s16, 1
        // Predicated region
        $region13: #{tpu_custom_call.1} parent=11 // pred_check
          %p220 = pneg %p75
        $region14: #{tpu_custom_call.1} parent=11 // pred_check_branch
          %222 = sbr.rel (%p220) target = $region16
        $region15: #{tpu_custom_call.1} parent=11 // pred_region
          %s224 = ssub.s32 1280, 1280
          %225 = vsyncadd [#allocation4], %s224
          %s226 = sshll.u32 [#allocation3], 4
          %s227 = int_to_ptr.vmem [resolvable:$true] %s226
          %232 = dma.hbm_to_vmem [thread:$0]  %s1, 1280, %s227, [#allocation4], 256, 256, 16
        $region16: #{tpu_custom_call.1} parent=11 // pred_fallthru
          _
      $region12: #{tpu_custom_call.1} parent=5 // pred_fallthru
        _
      %p233 = scmp.lt.s32.totalorder %s16, 4
      // Predicated region
      $region17: #{tpu_custom_call.1} parent=5 // pred_check
        %p234 = pneg %p233
      $region18: #{tpu_custom_call.1} parent=5 // pred_check_branch
        %236 = sbr.rel (%p234) target = $region20
      $region19: #{tpu_custom_call.1} parent=5 // pred_region
        // Predicated region
        $region21: #{tpu_custom_call.1} parent=19 // pred_check
          %p237 = pneg %p48
        $region22: #{tpu_custom_call.1} parent=19 // pred_check_branch
          %239 = sbr.rel (%p237) target = $region24
        $region23: #{tpu_custom_call.1} parent=19 // pred_region
          %p240 = scmp.lt.s32.totalorder %s23, 1
          %s241 = scalar_select %p240, %s23, 1
          %s242 = smul.addr %s241, 2
          %s243 = smul.addr %s242, 4
          %s244 = scalar_lea.vmem %s0, %s243
        $region24: #{tpu_custom_call.1} parent=19 // pred_fallthru
          _
        // Predicated region
        $region25: #{tpu_custom_call.1} parent=19 // pred_check
          %p245 = pneg %p95
        $region26: #{tpu_custom_call.1} parent=19 // pred_check_branch
          %247 = sbr.rel (%p245) target = $region28
        $region27: #{tpu_custom_call.1} parent=19 // pred_region
          %p248 = scmp.lt.s32.totalorder %s24, 1
          %s249 = scalar_select %p248, %s24, 1
          %s250 = smul.addr %s249, 4
          %s251 = scalar_lea.vmem %s2, %s250
        $region28: #{tpu_custom_call.1} parent=19 // pred_fallthru
          _
        // Predicated region
        $region29: #{tpu_custom_call.1} parent=19 // pred_check
          %p252 = pneg %p121
        $region30: #{tpu_custom_call.1} parent=19 // pred_check_branch
          %254 = sbr.rel (%p252) target = $region32
        $region31: #{tpu_custom_call.1} parent=19 // pred_region
          %p255 = scmp.lt.s32.totalorder %s24, 1
          %s256 = scalar_select %p255, %s24, 1
          %s257 = smul.addr %s256, 4
          %s258 = scalar_lea.vmem %s3, %s257
        $region32: #{tpu_custom_call.1} parent=19 // pred_fallthru
          _
        // Predicated region
        $region33: #{tpu_custom_call.1} parent=19 // pred_check
          %p259 = pneg %p147
        $region34: #{tpu_custom_call.1} parent=19 // pred_check_branch
          %261 = sbr.rel (%p259) target = $region36
        $region35: #{tpu_custom_call.1} parent=19 // pred_region
          %p262 = scmp.lt.s32.totalorder %s24, 1
          %s263 = scalar_select %p262, %s24, 1
          %s264 = smul.addr %s263, 4
          %s265 = scalar_lea.vmem %s4, %s264
        $region36: #{tpu_custom_call.1} parent=19 // pred_fallthru
          _
        // Predicated region
        $region37: #{tpu_custom_call.1} parent=19 // pred_check
          %p266 = pneg %p173
        $region38: #{tpu_custom_call.1} parent=19 // pred_check_branch
          %268 = sbr.rel (%p266) target = $region40
        $region39: #{tpu_custom_call.1} parent=19 // pred_region
          %p269 = scmp.lt.s32.totalorder %s24, 1
          %s270 = scalar_select %p269, %s24, 1
          %s271 = smul.addr %s270, 4
          %s272 = scalar_lea.vmem %s5, %s271
        $region40: #{tpu_custom_call.1} parent=19 // pred_fallthru
          _
      $region20: #{tpu_custom_call.1} parent=5 // pred_fallthru
        _
      %p273 = scmp.le.s32.totalorder 1, %s16
      %p274 = scmp.lt.s32.totalorder %s16, 5
      %p275 = pnand %p273, %p274
      %p276 = pneg %p275
      // Predicated region
      $region41: #{tpu_custom_call.1} parent=5 // pred_check
        _
      $region42: #{tpu_custom_call.1} parent=5 // pred_check_branch
        %278 = sbr.rel (%p275) target = $region44
      $region43: #{tpu_custom_call.1} parent=5 // pred_region
        %s279 = ssub.s32 %s16, 1
        // Predicated region
        $region45: #{tpu_custom_call.1} parent=43 // pred_check
          %p280 = pneg %p75
        $region46: #{tpu_custom_call.1} parent=43 // pred_check_branch
          %282 = sbr.rel (%p280) target = $region48
        $region47: #{tpu_custom_call.1} parent=43 // pred_region
          %283 = dma.done [#allocation4], 1280
        $region48: #{tpu_custom_call.1} parent=43 // pred_fallthru
          _
        %p284 = scmp.lt.s32.totalorder %s25, 1
        %s285 = scalar_select %p284, %s25, 1
        %s286 = smul.addr %s285, 2
        %s287 = smul.addr %s286, 4
        %s288 = scalar_lea.vmem %s0, %s287
        %p289 = pneg %p54
        %p290 = pneg %p51
        %p291 = pneg %p75
        %p292 = pneg %p72
        %p293 = scmp.lt.s32.totalorder %s26, 1
        %s294 = scalar_select %p293, %s26, 1
        %s295 = smul.addr %s294, 4
        %s296 = scalar_lea.vmem %s2, %s295
        %p297 = pneg %p101
        %p298 = pneg %p98
        %p299 = scmp.lt.s32.totalorder %s26, 1
        %s300 = scalar_select %p299, %s26, 1
        %s301 = smul.addr %s300, 4
        %s302 = scalar_lea.vmem %s3, %s301
        %p303 = pneg %p127
        %p304 = pneg %p124
        %p305 = scmp.lt.s32.totalorder %s26, 1
        %s306 = scalar_select %p305, %s26, 1
        %s307 = smul.addr %s306, 4
        %s308 = scalar_lea.vmem %s4, %s307
        %p309 = pneg %p153
        %p310 = pneg %p150
        %p311 = scmp.lt.s32.totalorder %s26, 1
        %s312 = scalar_select %p311, %s26, 1
        %s313 = smul.addr %s312, 4
        %s314 = scalar_lea.vmem %s5, %s313
        %p315 = pneg %p179
        %p316 = pneg %p176
        %p317 = pneg %p205
        %p318 = pneg %p202
        %s319 = sand.u32 %s192, 1
        %s320 = scalar_lea.sflag [#allocation5], %s319
        %s321 = sand.u32 %s192, 1
        %s322 = smul.addr %s321, 8
        %s323 = scalar_lea.vmem [#allocation6], %s322
        %p324 = scmp.lt.s32.totalorder %s25, 1
        %s325 = scalar_select %p324, %s25, 1
        %s326 = smul.addr %s325, 2
        %s327 = smul.addr %s326, 4
        %s328 = scalar_lea.vmem %s0, %s327
        %p329 = scmp.lt.s32.totalorder %s26, 1
        %s330 = scalar_select %p329, %s26, 1
        %s331 = smul.addr %s330, 4
        %s332 = scalar_lea.vmem %s2, %s331
        %p333 = scmp.lt.s32.totalorder %s26, 1
        %s334 = scalar_select %p333, %s26, 1
        %s335 = smul.addr %s334, 4
        %s336 = scalar_lea.vmem %s3, %s335
        %p337 = scmp.lt.s32.totalorder %s26, 1
        %s338 = scalar_select %p337, %s26, 1
        %s339 = smul.addr %s338, 4
        %s340 = scalar_lea.vmem %s4, %s339
        %p341 = scmp.lt.s32.totalorder %s26, 1
        %s342 = scalar_select %p341, %s26, 1
        %s343 = smul.addr %s342, 4
        %s344 = scalar_lea.vmem %s5, %s343
        %p345 = scmp.eq.s32.totalorder %s26, 0
        // Predicated region
        $region49: #{tpu_custom_call.1} parent=43 // pred_check
          %p346 = pneg %p345
        $region50: #{tpu_custom_call.1} parent=43 // pred_check_branch
          %348 = sbr.rel (%p346) target = $region52
        $region51: #{tpu_custom_call.1} parent=43 // pred_region
          %v349 = vld [vmem:[%s328] sm:$0xff]
          %350 = vst [vmem:[#allocation2] sm:$0xff] %v349
        $region52: #{tpu_custom_call.1} parent=43 // pred_fallthru
          _
        %v351 = vld [vmem:[#allocation2] sm:$0xff]
        %v352 = vld [vmem:[#allocation3] sm:$0xff]
        %v353 = vld [vmem:[#allocation3 + $0x8] sm:$0xff]
        %v354 = vld [vmem:[#allocation3 + $0x10] sm:$0xff]
        %v355 = vld [vmem:[#allocation3 + $0x18] sm:$0xff]
        %v356 = vld [vmem:[#allocation3 + $0x20] sm:$0xff]
        %v357 = vld [vmem:[#allocation3 + $0x28] sm:$0xff]
        %v358 = vld [vmem:[#allocation3 + $0x30] sm:$0xff]
        %v359 = vld [vmem:[#allocation3 + $0x38] sm:$0xff]
        %v360 = vld [vmem:[#allocation3 + $0x40] sm:$0xf]
        %v361 = vld [vmem:[#allocation3 + $0x48] sm:$0xf]
        %v362 = vld [vmem:[%s332] sm:$0xf]
        %v363 = vld [vmem:[%s336] sm:$0xf]
        %v365 = vcombine.high %v351, %v351
        %367 = vrot.lane.b32.xlu0 %v351, 17
        %v368 = vpop.permute.xlu0 %367
        %369 = vrot.lane.b32.xlu0 %v365, 17
        %v370 = vpop.permute.xlu0 %369
        %v371 = vlaneseq
        %v372 = vand.u32 %v371, 127
        %vm373 = vcmp.lt.s32.totalorder %v372, 17
        %v374 = vsel %vm373, %v368, %v370
        %v375 = vsel %vm373, %v370, %v368
        %376 = vrot.lane.b32.xlu0 %v351, 16
        %v377 = vpop.permute.xlu0 %376
        %378 = vrot.lane.b32.xlu0 %v365, 16
        %v379 = vpop.permute.xlu0 %378
        %vm380 = vcmp.lt.s32.totalorder %v372, 16
        %v381 = vsel %vm380, %v377, %v379
        %v382 = vsel %vm380, %v379, %v377
        %383 = vrot.lane.b32.xlu0 %v351, 15
        %v384 = vpop.permute.xlu0 %383
        %385 = vrot.lane.b32.xlu0 %v365, 15
        %v386 = vpop.permute.xlu0 %385
        %vm387 = vcmp.lt.s32.totalorder %v372, 15
        %v388 = vsel %vm387, %v384, %v386
        %v389 = vsel %vm387, %v386, %v384
        %390 = vrot.lane.b32.xlu0 %v351, 1
        %v391 = vpop.permute.xlu0 %390
        %392 = vrot.lane.b32.xlu0 %v365, 1
        %v393 = vpop.permute.xlu0 %392
        %vm394 = vcmp.lt.s32.totalorder %v372, 1
        %v395 = vsel %vm394, %v391, %v393
        %v396 = vsel %vm394, %v393, %v391
        %397 = vrot.lane.b32.xlu0 %v351, 127
        %v398 = vpop.permute.xlu0 %397
        %399 = vrot.lane.b32.xlu0 %v365, 127
        %v400 = vpop.permute.xlu0 %399
        %vm401 = vcmp.lt.s32.totalorder %v372, 127
        %v402 = vsel %vm401, %v398, %v400
        %v403 = vsel %vm401, %v400, %v398
        %404 = vrot.lane.b32.xlu0 %v351, 113
        %v405 = vpop.permute.xlu0 %404
        %406 = vrot.lane.b32.xlu0 %v365, 113
        %v407 = vpop.permute.xlu0 %406
        %vm408 = vcmp.lt.s32.totalorder %v372, 113
        %v409 = vsel %vm408, %v405, %v407
        %v410 = vsel %vm408, %v407, %v405
        %411 = vrot.lane.b32.xlu0 %v351, 112
        %v412 = vpop.permute.xlu0 %411
        %413 = vrot.lane.b32.xlu0 %v365, 112
        %v414 = vpop.permute.xlu0 %413
        %vm415 = vcmp.lt.s32.totalorder %v372, 112
        %v416 = vsel %vm415, %v412, %v414
        %v417 = vsel %vm415, %v414, %v412
        %418 = vrot.lane.b32.xlu0 %v351, 111
        %v419 = vpop.permute.xlu0 %418
        %420 = vrot.lane.b32.xlu0 %v365, 111
        %v421 = vpop.permute.xlu0 %420
        %vm422 = vcmp.lt.s32.totalorder %v372, 111
        %v423 = vsel %vm422, %v419, %v421
        %v424 = vsel %vm422, %v421, %v419
        %v427 = vrot.slane %v382, 4
        %v428 = vrot.slane %v381, 4
        %v433 = vrot.slane %v396, 4
        %v434 = vrot.slane %v395, 4
        %v439 = vrot.slane %v402, 4
        %v440 = vrot.slane %v403, 4
        %v445 = vrot.slane %v416, 4
        %v446 = vrot.slane %v417, 4
        %vm449 = vcmask 1043456
        %v450 = vsel %vm449, %v375, %v427
        %v451 = vsel %vm449, %v374, %v428
        %v452 = vsel %vm449, %v389, %v433
        %v453 = vsel %vm449, %v388, %v434
        %v454 = vsel %vm449, %v351, %v439
        %v455 = vsel %vm449, %v365, %v440
        %v456 = vsel %vm449, %v409, %v445
        %v457 = vsel %vm449, %v410, %v446
        %v458 = vmul.f32 %v450, %v352
        %v459 = vmul.f32 %v451, %v353
        %v460 = vmul.f32 %v452, %v354
        %v461 = vmul.f32 %v453, %v355
        %v462 = vmul.f32 %v454, %v356
        %v463 = vmul.f32 %v455, %v357
        %v464 = vmul.f32 %v456, %v358
        %v465 = vmul.f32 %v457, %v359
        %v466 = vmul.f32 %v423, %v360
        %v467 = vmul.f32 %v424, %v361
        %469 = vset.pattern.permute.xlu0 0
        %470 = vperm.xlu0 %469, %v363
        %v471 = vpop.permute.xlu0 %470
        %vm473 = vcmask 293888
        %v475 = vsel %vm473, %v362, 0
        %v478 = vsel %vm449, %v466, 0
        %v481 = vsel %vm449, %v467, 0
        %483 = vmatprep.subr.mxu0 %v459
        %484 = vmatpush1.msra.mxu0 %v458
        %485 = vmatprep.subr.mxu0 %v461
        %486 = vmatpush1.msra.mxu0 %v460
        %487 = vmatprep.subr.mxu0 %v463
        %488 = vmatpush1.msra.mxu0 %v462
        %489 = vmatprep.subr.mxu0 %v465
        %490 = vmatpush1.msra.mxu0 %v464
        %491 = vmatprep.subr.mxu0 %v481
        %492 = vmatpush1.msra.mxu0 %v478
        %493 = vmatprep.subr.mxu0 0.0
        %494 = vmatpush1.msra.mxu0 0.0
        %495 = vmatprep.subr.mxu0 0.0
        %496 = vmatpush1.msra.mxu0 0.0
        %497 = vmatprep.subr.mxu0 0.0
        %498 = vmatpush1.msra.mxu0 0.0
        %499 = vmatprep.subr.mxu0 0.0
        %500 = vmatpush1.msra.mxu0 0.0
        %501 = vmatprep.subr.mxu0 0.0
        %502 = vmatpush1.msra.mxu0 0.0
        %503 = vmatprep.subr.mxu0 0.0
        %504 = vmatpush1.msra.mxu0 0.0
        %505 = vmatprep.subr.mxu0 0.0
        %506 = vmatpush1.msra.mxu0 0.0
        %507 = vmatprep.subr.mxu0 0.0
        %508 = vmatpush1.msra.mxu0 0.0
        %509 = vmatprep.subr.mxu0 0.0
        %510 = vmatpush1.msra.mxu0 0.0
        %511 = vmatprep.subr.mxu0 0.0
        %512 = vmatpush1.msra.mxu0 0.0
        %513 = vmatprep.subr.mxu0 0.0
        %514 = vmatpush1.msra.mxu0 0.0
        %515 = vmatprep.subr.mxu0 0.0
        %516 = vmatpush1.msra.mxu0 0.0
        %517 = vmatprep.subr.mxu0 0.0
        %518 = vmatpush1.msra.mxu0 0.0
        %519 = vmatprep.subr.mxu0 0.0
        %520 = vmatpush1.msra.mxu0 0.0
        %521 = vmatprep.subr.mxu0 0.0
        %522 = vmatpush1.msra.mxu0 0.0
        %523 = vmatprep.subr.mxu0 0.0
        %524 = vmatpush1.msra.mxu0 0.0
        %525 = vmatprep.subr.mxu0 0.0
        %526 = vmatpush1.msra.mxu0 0.0
        %527 = vmatprep.subr.mxu0 0.0
        %528 = vmatpush1.msra.mxu0 0.0
        %529 = vmatprep.subr.mxu0 0.0
        %530 = vmatpush1.msra.mxu0 0.0
        %531 = vmatprep.subr.mxu0 0.0
        %532 = vmatpush1.msra.mxu0 0.0
        %533 = vmatprep.subr.mxu0 0.0
        %534 = vmatpush1.msra.mxu0 0.0
        %535 = vmatprep.subr.mxu0 0.0
        %536 = vmatpush1.msra.mxu0 0.0
        %537 = vmatprep.subr.mxu0 0.0
        %538 = vmatpush1.msra.mxu0 0.0
        %539 = vmatprep.subr.mxu0 0.0
        %540 = vmatpush1.msra.mxu0 0.0
        %541 = vmatprep.subr.mxu0 0.0
        %542 = vmatpush1.msra.mxu0 0.0
        %543 = vmatprep.subr.mxu0 0.0
        %544 = vmatpush1.msra.mxu0 0.0
        %545 = vmatprep.subr.mxu0 0.0
        %546 = vmatpush1.msra.mxu0 0.0
        %547 = vmatprep.mubr.f32.mxu0 0.0
        %548 = vmatmul.mubr.f32.gmra.mrb[0].mxu0 %v475
        %v549 = vpop.f32.mrb[0].mxu0
        %v550 = vadd.f32 %v471, %v549
        %v551 = vpop.f32.mrb[0].mxu0
        %v552 = vadd.f32 %v471, %v551
        %553 = vdwg.mxu0
        %v554 = vmax.f32 %v550, 0.0
        %v555 = vmax.f32 %v552, 0.0
        %v556 = vld [vmem:[%s340] sm:$0xf]
        %v557 = vld [vmem:[%s344] sm:$0xf]
        %558 = vrot.lane.b32.xlu0 %v554, 17
        %v559 = vpop.permute.xlu0 %558
        %560 = vrot.lane.b32.xlu0 %v555, 17
        %v561 = vpop.permute.xlu0 %560
        %v562 = vsel %vm373, %v559, %v561
        %v563 = vsel %vm373, %v561, %v559
        %564 = vrot.lane.b32.xlu0 %v554, 16
        %v565 = vpop.permute.xlu0 %564
        %566 = vrot.lane.b32.xlu0 %v555, 16
        %v567 = vpop.permute.xlu0 %566
        %v568 = vsel %vm380, %v565, %v567
        %v569 = vsel %vm380, %v567, %v565
        %570 = vrot.lane.b32.xlu0 %v554, 15
        %v571 = vpop.permute.xlu0 %570
        %572 = vrot.lane.b32.xlu0 %v555, 15
        %v573 = vpop.permute.xlu0 %572
        %v574 = vsel %vm387, %v571, %v573
        %v575 = vsel %vm387, %v573, %v571
        %576 = vrot.lane.b32.xlu0 %v554, 1
        %v577 = vpop.permute.xlu0 %576
        %578 = vrot.lane.b32.xlu0 %v555, 1
        %v579 = vpop.permute.xlu0 %578
        %v580 = vsel %vm394, %v577, %v579
        %v581 = vsel %vm394, %v579, %v577
        %582 = vrot.lane.b32.xlu0 %v554, 127
        %v583 = vpop.permute.xlu0 %582
        %584 = vrot.lane.b32.xlu0 %v555, 127
        %v585 = vpop.permute.xlu0 %584
        %v586 = vsel %vm401, %v583, %v585
        %v587 = vsel %vm401, %v585, %v583
        %588 = vrot.lane.b32.xlu0 %v554, 113
        %v589 = vpop.permute.xlu0 %588
        %590 = vrot.lane.b32.xlu0 %v555, 113
        %v591 = vpop.permute.xlu0 %590
        %v592 = vsel %vm408, %v589, %v591
        %v593 = vsel %vm408, %v591, %v589
        %594 = vrot.lane.b32.xlu0 %v554, 112
        %v595 = vpop.permute.xlu0 %594
        %596 = vrot.lane.b32.xlu0 %v555, 112
        %v597 = vpop.permute.xlu0 %596
        %v598 = vsel %vm415, %v595, %v597
        %v599 = vsel %vm415, %v597, %v595
        %600 = vrot.lane.b32.xlu0 %v554, 111
        %v601 = vpop.permute.xlu0 %600
        %602 = vrot.lane.b32.xlu0 %v555, 111
        %v603 = vpop.permute.xlu0 %602
        %v604 = vsel %vm422, %v601, %v603
        %v605 = vsel %vm422, %v603, %v601
        %v608 = vrot.slane %v569, 4
        %v609 = vrot.slane %v568, 4
        %v614 = vrot.slane %v581, 4
        %v615 = vrot.slane %v580, 4
        %v620 = vrot.slane %v586, 4
        %v621 = vrot.slane %v587, 4
        %v626 = vrot.slane %v598, 4
        %v627 = vrot.slane %v599, 4
        %v630 = vsel %vm449, %v563, %v608
        %v631 = vsel %vm449, %v562, %v609
        %v632 = vsel %vm449, %v575, %v614
        %v633 = vsel %vm449, %v574, %v615
        %v634 = vsel %vm449, %v554, %v620
        %v635 = vsel %vm449, %v555, %v621
        %v636 = vsel %vm449, %v592, %v626
        %v637 = vsel %vm449, %v593, %v627
        %v638 = vmul.f32 %v630, %v352
        %v639 = vmul.f32 %v631, %v353
        %v640 = vmul.f32 %v632, %v354
        %v641 = vmul.f32 %v633, %v355
        %v642 = vmul.f32 %v634, %v356
        %v643 = vmul.f32 %v635, %v357
        %v644 = vmul.f32 %v636, %v358
        %v645 = vmul.f32 %v637, %v359
        %v646 = vmul.f32 %v604, %v360
        %v647 = vmul.f32 %v605, %v361
        %649 = vset.pattern.permute.xlu0 0
        %650 = vperm.xlu0 %649, %v557
        %v651 = vpop.permute.xlu0 %650
        %v654 = vsel %vm473, %v556, 0
        %v657 = vsel %vm449, %v646, 0
        %v660 = vsel %vm449, %v647, 0
        %662 = vmatprep.subr.mxu0 %v639
        %663 = vmatpush1.msra.mxu0 %v638
        %664 = vmatprep.subr.mxu0 %v641
        %665 = vmatpush1.msra.mxu0 %v640
        %666 = vmatprep.subr.mxu0 %v643
        %667 = vmatpush1.msra.mxu0 %v642
        %668 = vmatprep.subr.mxu0 %v645
        %669 = vmatpush1.msra.mxu0 %v644
        %670 = vmatprep.subr.mxu0 %v660
        %671 = vmatpush1.msra.mxu0 %v657
        %672 = vmatprep.subr.mxu0 0.0
        %673 = vmatpush1.msra.mxu0 0.0
        %674 = vmatprep.subr.mxu0 0.0
        %675 = vmatpush1.msra.mxu0 0.0
        %676 = vmatprep.subr.mxu0 0.0
        %677 = vmatpush1.msra.mxu0 0.0
        %678 = vmatprep.subr.mxu0 0.0
        %679 = vmatpush1.msra.mxu0 0.0
        %680 = vmatprep.subr.mxu0 0.0
        %681 = vmatpush1.msra.mxu0 0.0
        %682 = vmatprep.subr.mxu0 0.0
        %683 = vmatpush1.msra.mxu0 0.0
        %684 = vmatprep.subr.mxu0 0.0
        %685 = vmatpush1.msra.mxu0 0.0
        %686 = vmatprep.subr.mxu0 0.0
        %687 = vmatpush1.msra.mxu0 0.0
        %688 = vmatprep.subr.mxu0 0.0
        %689 = vmatpush1.msra.mxu0 0.0
        %690 = vmatprep.subr.mxu0 0.0
        %691 = vmatpush1.msra.mxu0 0.0
        %692 = vmatprep.subr.mxu0 0.0
        %693 = vmatpush1.msra.mxu0 0.0
        %694 = vmatprep.subr.mxu0 0.0
        %695 = vmatpush1.msra.mxu0 0.0
        %696 = vmatprep.subr.mxu0 0.0
        %697 = vmatpush1.msra.mxu0 0.0
        %698 = vmatprep.subr.mxu0 0.0
        %699 = vmatpush1.msra.mxu0 0.0
        %700 = vmatprep.subr.mxu0 0.0
        %701 = vmatpush1.msra.mxu0 0.0
        %702 = vmatprep.subr.mxu0 0.0
        %703 = vmatpush1.msra.mxu0 0.0
        %704 = vmatprep.subr.mxu0 0.0
        %705 = vmatpush1.msra.mxu0 0.0
        %706 = vmatprep.subr.mxu0 0.0
        %707 = vmatpush1.msra.mxu0 0.0
        %708 = vmatprep.subr.mxu0 0.0
        %709 = vmatpush1.msra.mxu0 0.0
        %710 = vmatprep.subr.mxu0 0.0
        %711 = vmatpush1.msra.mxu0 0.0
        %712 = vmatprep.subr.mxu0 0.0
        %713 = vmatpush1.msra.mxu0 0.0
        %714 = vmatprep.subr.mxu0 0.0
        %715 = vmatpush1.msra.mxu0 0.0
        %716 = vmatprep.subr.mxu0 0.0
        %717 = vmatpush1.msra.mxu0 0.0
        %718 = vmatprep.subr.mxu0 0.0
        %719 = vmatpush1.msra.mxu0 0.0
        %720 = vmatprep.subr.mxu0 0.0
        %721 = vmatpush1.msra.mxu0 0.0
        %722 = vmatprep.subr.mxu0 0.0
        %723 = vmatpush1.msra.mxu0 0.0
        %724 = vmatprep.subr.mxu0 0.0
        %725 = vmatpush1.msra.mxu0 0.0
        %726 = vmatprep.mubr.f32.mxu0 0.0
        %727 = vmatmul.mubr.f32.gmra.mrb[0].mxu0 %v654
        %v728 = vpop.f32.mrb[0].mxu0
        %v729 = vadd.f32 %v651, %v728
        %v730 = vpop.f32.mrb[0].mxu0
        %v731 = vadd.f32 %v651, %v730
        %732 = vdwg.mxu0
        %v735 = vcombine.low %v729, %v731
        %v737 = vadd.f32 %v351, %v735
        %738 = vst [vmem:[#allocation2] sm:$0xff] %v737
        %p739 = scmp.eq.s32.totalorder %s26, 1
        // Predicated region
        $region53: #{tpu_custom_call.1} parent=43 // pred_check
          %p740 = pneg %p739
        $region54: #{tpu_custom_call.1} parent=43 // pred_check_branch
          %742 = sbr.rel (%p740) target = $region56
        $region55: #{tpu_custom_call.1} parent=43 // pred_region
          %743 = vst [vmem:[%s323] sm:$0xff] %v737
        $region56: #{tpu_custom_call.1} parent=43 // pred_fallthru
          _
        %s744 = sand.u32 %s192, 1
        %s745 = scalar_lea.sflag [#allocation5], %s744
        %s746 = sand.u32 %s192, 1
        %s747 = smul.addr %s746, 8
        %s748 = scalar_lea.vmem [#allocation6], %s747
        // Predicated region
        $region57: #{tpu_custom_call.1} parent=43 // pred_check
          %p749 = pneg %p202
        $region58: #{tpu_custom_call.1} parent=43 // pred_check_branch
          %751 = sbr.rel (%p749) target = $region60
        $region59: #{tpu_custom_call.1} parent=43 // pred_region
          %s753 = ssub.s32 128, 128
          %754 = vsyncadd %s745, %s753
          %s755 = smul.addr %s25, 2
          %s756 = smul.addr %s755, 64
          %s757 = scalar_lea.hbm %s6, %s756
          %s759 = sshll.u32 %s748, 4
          %s760 = int_to_ptr.vmem [resolvable:$true] %s759
          %762 = dma.vmem_to_hbm [thread:$0]  %s760, 128, %s757, %s745
        $region60: #{tpu_custom_call.1} parent=43 // pred_fallthru
          _
      $region44: #{tpu_custom_call.1} parent=5 // pred_fallthru
        _
      %p763 = scmp.le.s32.totalorder 2, %s16
      // Predicated region
      $region61: #{tpu_custom_call.1} parent=5 // pred_check
        %p764 = pneg %p763
      $region62: #{tpu_custom_call.1} parent=5 // pred_check_branch
        %766 = sbr.rel (%p764) target = $region64
      $region63: #{tpu_custom_call.1} parent=5 // pred_region
        %s767 = ssub.s32 %s16, 2
        // Predicated region
        $region65: #{tpu_custom_call.1} parent=63 // pred_check
          %p768 = pneg %p208
        $region66: #{tpu_custom_call.1} parent=63 // pred_check_branch
          %770 = sbr.rel (%p768) target = $region68
        $region67: #{tpu_custom_call.1} parent=63 // pred_region
          %s771 = sand.u32 %s193, 1
          %s772 = scalar_lea.sflag [#allocation5], %s771
          %s773 = sand.u32 %s193, 1
          %s774 = smul.addr %s773, 8
          %s775 = scalar_lea.vmem [#allocation6], %s774
          %776 = dma.done %s772, 128
        $region68: #{tpu_custom_call.1} parent=63 // pred_fallthru
          _
      $region64: #{tpu_custom_call.1} parent=5 // pred_fallthru
        _
    $region6: #{tpu_custom_call.1} parent=1 // loop_footer
      %s20 = sadd.s32 1, %s16
    $region7: #{tpu_custom_call.1} parent=1 // loop_footer_branch
      %15 = sbr.rel target = $region3
    $region8: #{tpu_custom_call.1} parent=1 // loop_exit
      _
    %777 = vsyncpa [#allocation4], 1
    %s778 = scalar_lea.sflag [#allocation4], 1
    %779 = vsyncpa %s778, 1
    %780 = vsyncpa [#allocation5], 1
    %s781 = scalar_lea.sflag [#allocation5], 1
    %782 = vsyncpa %s781, 1

</llo_original>
